<compile_context>
chip_gen: v5e
topology: v5e:2x2
jax: 0.10.0
libtpu: 0.0.40
codegen_flags: <defaults>
</compile_context>

<pallas_src>
import jax
import jax.numpy as jnp
from jax.experimental import pallas as pl
from jax.experimental.pallas import tpu as pltpu


def _round_up(a, b):
    return (a + b - 1) // b * b


def make_cnn_kernel(L):
    """Fused forward: (pre-im2col'd) matmul -> bias -> ReLU -> mask -> max -> FC."""

    def kernel(x_ref, w_all_ref, b_all_ref, mask_ref, w_fc_ref, b_fc_ref, out_ref):
        TBL = x_ref.shape[0]          # TB * L rows, lane-dense Kp columns
        TB = TBL // L
        nFp = w_all_ref.shape[1]

        # One MXU matmul covering every filter size / every filter at once.
        win = x_ref[...]                                          # (TB*L, Kp)
        conv = jnp.dot(win, w_all_ref[...],
                       preferred_element_type=jnp.float32)        # (TB*L, nFp) f32

        # bias + ReLU (f32 VPU), then zero time positions that are out of range
        # for smaller filter sizes (ReLU >= 0, so zeros never win the max).
        acti = jnp.maximum(conv + b_all_ref[...], 0.0)
        acti = acti.reshape(TB, L, nFp) * mask_ref[...][None, :, :]
        feat = jnp.max(acti, axis=1)                              # (TB, nFp)

        # Dropout is identity in eval mode.  FC stays f32.
        logits = jnp.dot(feat, w_fc_ref[...],
                         preferred_element_type=jnp.float32) + b_fc_ref[...]
        out_ref[...] = logits.astype(out_ref.dtype)

    return kernel


def _pick_batch_tiling(B, *, tb_max=256, min_grid=2):
    """Batch tile TB (multiple of 8) and padded batch B_pad with >= min_grid steps."""
    TB = min(tb_max, max(8, _round_up(-(-B // min_grid), 8)))
    B_pad = _round_up(B, TB)
    if B_pad // TB < min_grid:
        B_pad = min_grid * TB          # keep both TensorCores busy on v7x
    return TB, B_pad


def textcnn_forward(x, conv_ws, conv_bs, w_fc, b_fc, *,
                    compute_dtype=jnp.bfloat16):
    """x: (B, L, 64); conv_ws[i]: (k_i, 64, F); conv_bs[i]: (1, F);
       w_fc: (n*F, C); b_fc: (1, C).  Returns (B, C) float32 logits."""
    B, L, D = x.shape
    filter_sizes = tuple(int(w.shape[0]) for w in conv_ws)
    F = int(conv_ws[0].shape[-1])
    nF = F * len(filter_sizes)
    C = int(w_fc.shape[1])
    kmax = max(filter_sizes)

    # Lane-dense paddings.
    K = kmax * D
    Kp = 128 if K <= 128 else _round_up(K, 256)   # fill the 256-wide MXU K dim
    nFp = _round_up(nF, 128)                      # lane-dense conv-output width
    C_pad = _round_up(C, 128)                     # lane-dense FC output

    # ---- pack all conv weights into one (Kp, nFp) matrix (zero-padded) ----
    blocks = []
    for w in conv_ws:
        k = int(w.shape[0])
        w2 = w.reshape(k * D, F).astype(jnp.float32)
        if k * D < Kp:
            w2 = jnp.concatenate(
                [w2, jnp.zeros((Kp - k * D, F), jnp.float32)], axis=0)
        blocks.append(w2)
    w_cat = jnp.concatenate(blocks, axis=1)                           # (Kp, nF)
    w_all = jnp.zeros((Kp, nFp), jnp.float32).at[:, :nF].set(w_cat)
    w_all = w_all.astype(compute_dtype)           # MXU operand; VPU math stays f32

    b_cat = jnp.concatenate(
        [b.reshape(1, F).astype(jnp.float32) for b in conv_bs], axis=1)
    b_all = jnp.zeros((1, nFp), jnp.float32).at[:, :nF].set(b_cat)    # (1, nFp)

    # Valid-time mask: position t is valid for filter size k iff t <= L - k.
    t_idx = jnp.arange(L, dtype=jnp.int32)[:, None]
    mask_cols = [jnp.broadcast_to((t_idx <= (L - k)).astype(jnp.float32), (L, F))
                 for k in filter_sizes]
    pos_mask = jnp.zeros((L, nFp), jnp.float32).at[:, :nF].set(
        jnp.concatenate(mask_cols, axis=1))                           # (L, nFp)

    # FC weight/bias, padded lane-dense (extra rows/cols are zero).
    w_fc_p = jnp.zeros((nFp, C_pad), jnp.float32).at[:nF, :C].set(
        w_fc.astype(jnp.float32))
    b_fc_p = jnp.zeros((1, C_pad), jnp.float32).at[:, :C].set(
        b_fc.reshape(1, C).astype(jnp.float32))

    # ---- batch tiling (TB=256 for large B; >= 2 grid steps for v7x dual-TC) ----
    TB, B_pad = _pick_batch_tiling(B)

    # ---- im2col in the wrapper: lane-dense (B_pad*L, Kp) matmul LHS ----
    x_pad = jnp.zeros((B_pad, L + kmax - 1, D), jnp.float32)
    x_pad = x_pad.at[:B, :L, :].set(x.astype(jnp.float32))
    x_win = jnp.concatenate([x_pad[:, i:i + L, :] for i in range(kmax)],
                            axis=-1)                                  # (B_pad, L, K)
    if K < Kp:
        x_win = jnp.concatenate(
            [x_win, jnp.zeros((B_pad, L, Kp - K), jnp.float32)], axis=-1)
    x_im2col = x_win.reshape(B_pad * L, Kp).astype(compute_dtype)

    # VMEM budget (worst case, TB=256, f32): x tile 2x4 MiB double-buffered +
    # ~2 MiB f32 conv intermediate + <0.2 MiB weights  ->  well under the
    # 32 MiB scoped default on v5e/v6e/v7x, so no vmem_limit override needed.
    kernel = make_cnn_kernel(L)
    grid = (B_pad // TB,)

    out = pl.pallas_call(
        kernel,
        out_shape=jax.ShapeDtypeStruct((B_pad, C_pad), jnp.float32),
        grid=grid,
        in_specs=[
            pl.BlockSpec((TB * L, Kp), lambda i: (i, 0)),     # im2col'd x (pipelined)
            pl.BlockSpec((Kp, nFp), lambda i: (0, 0)),        # packed conv weights
            pl.BlockSpec((1, nFp), lambda i: (0, 0)),         # packed conv bias
            pl.BlockSpec((L, nFp), lambda i: (0, 0)),         # valid-time mask
            pl.BlockSpec((nFp, C_pad), lambda i: (0, 0)),     # FC weight (padded)
            pl.BlockSpec((1, C_pad), lambda i: (0, 0)),       # FC bias (padded)
        ],
        out_specs=pl.BlockSpec((TB, C_pad), lambda i: (i, 0)),
        compiler_params=pltpu.CompilerParams(
            dimension_semantics=("parallel",)),
    )(x_im2col, w_all, b_all, pos_mask, w_fc_p, b_fc_p)

    return out[:B, :C]


def ref_forward(x, conv_ws, conv_bs, w_fc, b_fc):
    """Plain-JAX reference mirroring the PyTorch forward (eval mode)."""
    feats = []
    for w, b in zip(conv_ws, conv_bs):
        k = w.shape[0]
        T = x.shape[1] - k + 1
        acc = jnp.zeros((x.shape[0], T, w.shape[-1]), jnp.float32)
        for i in range(k):
            acc = acc + jnp.einsum('btd,df->btf', x[:, i:i + T, :], w[i],
                                   precision=jax.lax.Precision.HIGHEST)
        acc = jax.nn.relu(acc + b[None, :, :])
        feats.append(jnp.max(acc, axis=1))
    feat = jnp.concatenate(feats, axis=-1)
    return jnp.dot(feat, w_fc, precision=jax.lax.Precision.HIGHEST) + b_fc


if __name__ == "__main__":
    # Small config consistent with the module (embedding width fixed at 64 by
    # the Conv2d kernel shape (k, 64)).
    B, L, D = 2, 16, 64
    num_filters = 8
    filter_sizes = (2, 3, 4)
    num_classes = 5

    key = jax.random.PRNGKey(0)
    n_keys = 1 + 2 * len(filter_sizes) + 2
    keys = jax.random.split(key, n_keys)

    x = jax.random.normal(keys[0], (B, L, D), dtype=jnp.float32)

    conv_ws, conv_bs = [], []
    for idx, k in enumerate(filter_sizes):
        conv_ws.append(
            0.1 * jax.random.normal(keys[1 + 2 * idx], (k, D, num_filters),
                                    dtype=jnp.float32))
        conv_bs.append(
            0.1 * jax.random.normal(keys[2 + 2 * idx], (1, num_filters),
                                    dtype=jnp.float32))
    w_fc = 0.1 * jax.random.normal(
        keys[-2], (num_filters * len(filter_sizes), num_classes),
        dtype=jnp.float32)
    b_fc = 0.1 * jax.random.normal(keys[-1], (1, num_classes),
                                   dtype=jnp.float32)

    # f32 MXU-operand path
    out = textcnn_forward(x, conv_ws, conv_bs, w_fc, b_fc,
                          compute_dtype=jnp.float32)
    out = jax.block_until_ready(out)
    ref = ref_forward(x, conv_ws, conv_bs, w_fc, b_fc)
    assert out.shape == (B, num_classes)
    assert jnp.allclose(out, ref, atol=1e-3, rtol=1e-3), (out, ref)

    # Default bf16 MXU-operand path (all generations), compared against a
    # reference using the same bf16-quantized conv operands (FC stays f32).
    out_bf16 = textcnn_forward(x, conv_ws, conv_bs, w_fc, b_fc)
    out_bf16 = jax.block_until_ready(out_bf16)
    x_q = x.astype(jnp.bfloat16).astype(jnp.float32)
    conv_ws_q = [w.astype(jnp.bfloat16).astype(jnp.float32) for w in conv_ws]
    ref_q = ref_forward(x_q, conv_ws_q, conv_bs, w_fc, b_fc)
    assert jnp.allclose(out_bf16, ref_q, atol=5e-3, rtol=5e-3), (out_bf16, ref_q)

    print("KERNEL_OK")
</pallas_src>

<mosaic_0001>
module attributes {stable_mosaic.version = 11 : i64} {
  func.func @kernel(%arg0: i32, %arg1: memref<128x256xf32, #tpu.memory_space<vmem>>, %arg2: memref<256x128xf32, #tpu.memory_space<vmem>>, %arg3: memref<1x128xf32, #tpu.memory_space<vmem>>, %arg4: memref<16x128xf32, #tpu.memory_space<vmem>>, %arg5: memref<128x128xf32, #tpu.memory_space<vmem>>, %arg6: memref<1x128xf32, #tpu.memory_space<vmem>>, %arg7: memref<8x128xf32, #tpu.memory_space<vmem>>) attributes {dimension_semantics = [#tpu.dimension_semantics<parallel>], iteration_bounds = array<i64: 2>, scalar_prefetch = 0 : i64, scratch_operands = 0 : i64, tpu.core_type = #tpu.core_type<tc>, window_params = [{transform_indices = @transform_0, window_bounds = array<i64: 128, 256>}, {pipeline_mode = #tpu.pipeline_mode<synchronous>, transform_indices = @transform_1, window_bounds = array<i64: 256, 128>}, {pipeline_mode = #tpu.pipeline_mode<synchronous>, transform_indices = @transform_2, window_bounds = array<i64: 1, 128>}, {pipeline_mode = #tpu.pipeline_mode<synchronous>, transform_indices = @transform_3, window_bounds = array<i64: 16, 128>}, {pipeline_mode = #tpu.pipeline_mode<synchronous>, transform_indices = @transform_4, window_bounds = array<i64: 128, 128>}, {pipeline_mode = #tpu.pipeline_mode<synchronous>, transform_indices = @transform_5, window_bounds = array<i64: 1, 128>}, {transform_indices = @transform_6, window_bounds = array<i64: 8, 128>}]} {
    %c0 = arith.constant 0 : index
    %c0_0 = arith.constant 0 : index
    %0 = vector.load %arg1[%c0, %c0_0] : memref<128x256xf32, #tpu.memory_space<vmem>>, vector<128x256xf32>
    %c0_1 = arith.constant 0 : index
    %c0_2 = arith.constant 0 : index
    %1 = vector.load %arg2[%c0_1, %c0_2] : memref<256x128xf32, #tpu.memory_space<vmem>>, vector<256x128xf32>
    %cst = arith.constant dense<0.000000e+00> : vector<128x128xf32>
    %2 = tpu.matmul %0, %1, %cst {dimension_numbers = #tpu.dot_dimension_numbers<[1], [0], [0], [1], [0, 0, 1, 1], [], []>} : vector<128x256xf32>, vector<256x128xf32>, vector<128x128xf32> -> vector<128x128xf32>
    %c0_3 = arith.constant 0 : index
    %c0_4 = arith.constant 0 : index
    %3 = vector.load %arg3[%c0_3, %c0_4] : memref<1x128xf32, #tpu.memory_space<vmem>>, vector<1x128xf32>
    %4 = vector.broadcast %3 : vector<1x128xf32> to vector<128x128xf32>
    %5 = arith.addf %2, %4 : vector<128x128xf32>
    %cst_5 = arith.constant 0.000000e+00 : f32
    %6 = vector.broadcast %cst_5 : f32 to vector<128x128xf32>
    %7 = arith.maximumf %5, %6 : vector<128x128xf32>
    %8 = vector.shape_cast %7 : vector<128x128xf32> to vector<8x16x128xf32>
    %c0_6 = arith.constant 0 : index
    %c0_7 = arith.constant 0 : index
    %9 = vector.load %arg4[%c0_6, %c0_7] : memref<16x128xf32, #tpu.memory_space<vmem>>, vector<16x128xf32>
    %10 = vector.shape_cast %9 : vector<16x128xf32> to vector<1x16x128xf32>
    %11 = vector.broadcast %10 : vector<1x16x128xf32> to vector<8x16x128xf32>
    %12 = arith.mulf %8, %11 : vector<8x16x128xf32>
    %cst_8 = arith.constant dense<0xFF800000> : vector<8x128xf32>
    %13 = vector.multi_reduction <maximumf>, %12, %cst_8 [1] : vector<8x16x128xf32> to vector<8x128xf32>
    %c0_9 = arith.constant 0 : index
    %c0_10 = arith.constant 0 : index
    %14 = vector.load %arg5[%c0_9, %c0_10] : memref<128x128xf32, #tpu.memory_space<vmem>>, vector<128x128xf32>
    %cst_11 = arith.constant dense<0.000000e+00> : vector<8x128xf32>
    %15 = tpu.matmul %13, %14, %cst_11 {dimension_numbers = #tpu.dot_dimension_numbers<[1], [0], [0], [1], [0, 0, 1, 1], [], []>} : vector<8x128xf32>, vector<128x128xf32>, vector<8x128xf32> -> vector<8x128xf32>
    %c0_12 = arith.constant 0 : index
    %c0_13 = arith.constant 0 : index
    %16 = vector.load %arg6[%c0_12, %c0_13] : memref<1x128xf32, #tpu.memory_space<vmem>>, vector<1x128xf32>
    %17 = vector.broadcast %16 : vector<1x128xf32> to vector<8x128xf32>
    %18 = arith.addf %15, %17 : vector<8x128xf32>
    %c0_14 = arith.constant 0 : index
    %c0_15 = arith.constant 0 : index
    %19 = vector.load %arg7[%c0_14, %c0_15] : memref<8x128xf32, #tpu.memory_space<vmem>>, vector<8x128xf32>
    tpu.vector_store %arg7[%c0_14, %c0_15], %18 {strides = array<i32>} : memref<8x128xf32, #tpu.memory_space<vmem>>, vector<8x128xf32>,
    return
  }
  func.func @transform_0(%arg0: i32) -> (i32, i32) {
    %c0_i32 = arith.constant 0 : i32
    %c0_i32_0 = arith.constant 0 : i32
    return %arg0, %c0_i32 : i32, i32
  }
  func.func @transform_1(%arg0: i32) -> (i32, i32) {
    %c0_i32 = arith.constant 0 : i32
    %c0_i32_0 = arith.constant 0 : i32
    %c0_i32_1 = arith.constant 0 : i32
    return %c0_i32, %c0_i32_0 : i32, i32
  }
  func.func @transform_2(%arg0: i32) -> (i32, i32) {
    %c0_i32 = arith.constant 0 : i32
    %c0_i32_0 = arith.constant 0 : i32
    %c0_i32_1 = arith.constant 0 : i32
    return %c0_i32, %c0_i32_0 : i32, i32
  }
  func.func @transform_3(%arg0: i32) -> (i32, i32) {
    %c0_i32 = arith.constant 0 : i32
    %c0_i32_0 = arith.constant 0 : i32
    %c0_i32_1 = arith.constant 0 : i32
    return %c0_i32, %c0_i32_0 : i32, i32
  }
  func.func @transform_4(%arg0: i32) -> (i32, i32) {
    %c0_i32 = arith.constant 0 : i32
    %c0_i32_0 = arith.constant 0 : i32
    %c0_i32_1 = arith.constant 0 : i32
    return %c0_i32, %c0_i32_0 : i32, i32
  }
  func.func @transform_5(%arg0: i32) -> (i32, i32) {
    %c0_i32 = arith.constant 0 : i32
    %c0_i32_0 = arith.constant 0 : i32
    %c0_i32_1 = arith.constant 0 : i32
    return %c0_i32, %c0_i32_0 : i32, i32
  }
  func.func @transform_6(%arg0: i32) -> (i32, i32) {
    %c0_i32 = arith.constant 0 : i32
    %c0_i32_0 = arith.constant 0 : i32
    return %arg0, %c0_i32 : i32, i32
  }
}

</mosaic_0001>

<llo_original>
// kernel: tpu_custom_call.1
$region0: #{tpu_custom_call.1}
  #allocation0 [shape = 'u32[]', space=smem, size = 0x4, offset = 0x4, fixed_abs, tag = 'smem constant byte address 0x4 - core index']
  #allocation1 [shape = 'u32[72,128]{1,0:T(1,128)}', space=vmem, size = 0x9000, scoped, tag = 'internal scratch']
  %s0 = inlined_call_operand.hbm [shape: f32[256,256], index: 0, kind: input, shape index: {}]
  %s1 = inlined_call_operand.hbm [shape: f32[256,128], index: 1, kind: input, shape index: {}]
  %s2 = inlined_call_operand.vmem [shape: f32[1,128], index: 2, kind: input, shape index: {}]
  %s3 = inlined_call_operand.hbm [shape: f32[16,128], index: 3, kind: input, shape index: {}]
  %s4 = inlined_call_operand.hbm [shape: f32[128,128], index: 4, kind: input, shape index: {}]
  %s5 = inlined_call_operand.vmem [shape: f32[1,128], index: 5, kind: input, shape index: {}]
  %s6 = inlined_call_operand.hbm [shape: f32[16,128], index: 6, kind: output, shape index: {}]
  %s7 = sld [smem:[#allocation0]]
  $region73: #{tpu_custom_call.1} parent=0
    _
  %s9 = ssub.s32 1, %s7
  %s10 = scalar_select 0, %s9, %s7
  $region1: #{tpu_custom_call.1} parent=0
    #allocation2 [shape = 'u8[262144]{0}', space=vmem, size = 0x40000, scoped, tag = 'input window, operand 0']
    #allocation3 [shape = 's32[2]{0}', space=sflag, size = 0x8, scoped, tag = 'scoped memory for tpu_custom_call.1']
    #allocation4 [shape = 's32[2]{0}', space=sflag, size = 0x8, scoped, tag = 'scoped memory for tpu_custom_call.1']
    #allocation5 [shape = 'u8[131072]{0}', space=vmem, size = 0x20000, scoped, tag = 'input window, operand 1, single buffered']
    #allocation6 [shape = 's32[1]{0}', space=sflag, size = 0x4, scoped, tag = 'scoped memory for tpu_custom_call.1']
    #allocation7 [shape = 'u8[8192]{0}', space=vmem, size = 0x2000, scoped, tag = 'input window, operand 3, single buffered']
    #allocation8 [shape = 'u8[65536]{0}', space=vmem, size = 0x10000, scoped, tag = 'input window, operand 4, single buffered']
    #allocation9 [shape = 's32[1]{0}', space=sflag, size = 0x4, scoped, tag = 'scoped memory for tpu_custom_call.1']
    #allocation10 [shape = 'u8[8192]{0}', space=vmem, size = 0x2000, scoped, tag = 'output window, operand 0']
    %11 = vsyncpa [#allocation3], 0
    %s12 = scalar_lea.sflag [#allocation3], 1
    %13 = vsyncpa %s12, 0
    %14 = vsyncpa [#allocation6], 0
    %15 = vsyncpa [#allocation9], 0
    %16 = vsyncpa [#allocation4], 0
    %s17 = scalar_lea.sflag [#allocation4], 1
    %18 = vsyncpa %s17, 0
    loop: start=0, step=1, limit=4
    $region2: #{tpu_custom_call.1} parent=1 // loop_pre_header
      _
    $region3: #{tpu_custom_call.1} parent=1 // loop_header
      %s20 = sphi 0, %s24
      %p21 = scmp.ge.s32.totalorder %s20, 4
      %s30 = sphi 0, %s32
      %s33 = sphi 0, %s30
      %s34 = sphi 0, %s33
      %s50 = sphi 0, %s34
      %s54 = sphi 0, %s54
      %s56 = sphi 0, %s54
      %s57 = sphi 0, %s56
      %s71 = sphi 0, %s57
      %s75 = sphi 0, %s75
      %s77 = sphi 0, %s75
      %s78 = sphi 0, %s77
      %s92 = sphi 0, %s78
      %s96 = sphi 0, %s96
      %s98 = sphi 0, %s96
      %s99 = sphi 0, %s98
      %s113 = sphi 0, %s99
      %s117 = sphi 0, %s117
      %s119 = sphi 0, %s117
      %s120 = sphi 0, %s119
      %s134 = sphi 0, %s120
      %s138 = sphi 0, %s138
      %s140 = sphi 0, %s138
      %s141 = sphi 0, %s140
      %s155 = sphi 0, %s141
      %s161 = sphi 0, %s163
      %s164 = sphi 0, %s161
      %s165 = sphi 0, %s164
      %s181 = sphi 0, %s165
    $region4: #{tpu_custom_call.1} parent=1 // loop_header_branch
      %23 = sbr.rel (%p21) target = $region8
    $region5: #{tpu_custom_call.1} parent=1 // loop_body
      %s25 = ssub.s32 %s20, 1
      %s26 = ssub.s32 %s20, 2
      %s27 = sadd.s32 %s20, 1
      %s28 = ssub.s32 %s20, %s27
      %p29 = scmp.eq.s32.totalorder %s28, 0
      %s31 = sadd.s32 %s30, 1
      %s32 = scalar_select %p29, %s30, %s31
      %p35 = pneg %p29
      %p36 = scmp.eq.s32.totalorder %s20, 1
      %p37 = por %p35, %p36
      %p38 = scmp.ne.s32.totalorder %s30, %s33
      %p39 = scmp.eq.s32.totalorder %s20, 0
      %p40 = por %p38, %p39
      %p41 = scmp.ne.s32.totalorder %s30, %s33
      %p42 = scmp.eq.s32.totalorder %s25, 1
      %p43 = por %p41, %p42
      %p44 = scmp.ne.s32.totalorder %s33, %s34
      %p45 = scmp.eq.s32.totalorder %s25, 0
      %p46 = por %p44, %p45
      %p47 = scmp.ne.s32.totalorder %s33, %s34
      %p48 = scmp.eq.s32.totalorder %s26, 1
      %p49 = por %p47, %p48
      %p51 = scmp.ne.s32.totalorder %s34, %s50
      %p52 = scmp.eq.s32.totalorder %s26, 0
      %p53 = por %p51, %p52
      %s55 = sadd.s32 %s54, 1
      %p58 = scmp.eq.s32.totalorder %s20, 1
      %p59 = scmp.ne.s32.totalorder %s54, %s56
      %p60 = scmp.eq.s32.totalorder %s20, 0
      %p61 = por %p59, %p60
      %p62 = scmp.ne.s32.totalorder %s54, %s56
      %p63 = scmp.eq.s32.totalorder %s25, 1
      %p64 = por %p62, %p63
      %p65 = scmp.ne.s32.totalorder %s56, %s57
      %p66 = scmp.eq.s32.totalorder %s25, 0
      %p67 = por %p65, %p66
      %p68 = scmp.ne.s32.totalorder %s56, %s57
      %p69 = scmp.eq.s32.totalorder %s26, 1
      %p70 = por %p68, %p69
      %p72 = scmp.ne.s32.totalorder %s57, %s71
      %p73 = scmp.eq.s32.totalorder %s26, 0
      %p74 = por %p72, %p73
      %s76 = sadd.s32 %s75, 1
      %p79 = scmp.eq.s32.totalorder %s20, 1
      %p80 = scmp.ne.s32.totalorder %s75, %s77
      %p81 = scmp.eq.s32.totalorder %s20, 0
      %p82 = por %p80, %p81
      %p83 = scmp.ne.s32.totalorder %s75, %s77
      %p84 = scmp.eq.s32.totalorder %s25, 1
      %p85 = por %p83, %p84
      %p86 = scmp.ne.s32.totalorder %s77, %s78
      %p87 = scmp.eq.s32.totalorder %s25, 0
      %p88 = por %p86, %p87
      %p89 = scmp.ne.s32.totalorder %s77, %s78
      %p90 = scmp.eq.s32.totalorder %s26, 1
      %p91 = por %p89, %p90
      %p93 = scmp.ne.s32.totalorder %s78, %s92
      %p94 = scmp.eq.s32.totalorder %s26, 0
      %p95 = por %p93, %p94
      %s97 = sadd.s32 %s96, 1
      %p100 = scmp.eq.s32.totalorder %s20, 1
      %p101 = scmp.ne.s32.totalorder %s96, %s98
      %p102 = scmp.eq.s32.totalorder %s20, 0
      %p103 = por %p101, %p102
      %p104 = scmp.ne.s32.totalorder %s96, %s98
      %p105 = scmp.eq.s32.totalorder %s25, 1
      %p106 = por %p104, %p105
      %p107 = scmp.ne.s32.totalorder %s98, %s99
      %p108 = scmp.eq.s32.totalorder %s25, 0
      %p109 = por %p107, %p108
      %p110 = scmp.ne.s32.totalorder %s98, %s99
      %p111 = scmp.eq.s32.totalorder %s26, 1
      %p112 = por %p110, %p111
      %p114 = scmp.ne.s32.totalorder %s99, %s113
      %p115 = scmp.eq.s32.totalorder %s26, 0
      %p116 = por %p114, %p115
      %s118 = sadd.s32 %s117, 1
      %p121 = scmp.eq.s32.totalorder %s20, 1
      %p122 = scmp.ne.s32.totalorder %s117, %s119
      %p123 = scmp.eq.s32.totalorder %s20, 0
      %p124 = por %p122, %p123
      %p125 = scmp.ne.s32.totalorder %s117, %s119
      %p126 = scmp.eq.s32.totalorder %s25, 1
      %p127 = por %p125, %p126
      %p128 = scmp.ne.s32.totalorder %s119, %s120
      %p129 = scmp.eq.s32.totalorder %s25, 0
      %p130 = por %p128, %p129
      %p131 = scmp.ne.s32.totalorder %s119, %s120
      %p132 = scmp.eq.s32.totalorder %s26, 1
      %p133 = por %p131, %p132
      %p135 = scmp.ne.s32.totalorder %s120, %s134
      %p136 = scmp.eq.s32.totalorder %s26, 0
      %p137 = por %p135, %p136
      %s139 = sadd.s32 %s138, 1
      %p142 = scmp.eq.s32.totalorder %s20, 1
      %p143 = scmp.ne.s32.totalorder %s138, %s140
      %p144 = scmp.eq.s32.totalorder %s20, 0
      %p145 = por %p143, %p144
      %p146 = scmp.ne.s32.totalorder %s138, %s140
      %p147 = scmp.eq.s32.totalorder %s25, 1
      %p148 = por %p146, %p147
      %p149 = scmp.ne.s32.totalorder %s140, %s141
      %p150 = scmp.eq.s32.totalorder %s25, 0
      %p151 = por %p149, %p150
      %p152 = scmp.ne.s32.totalorder %s140, %s141
      %p153 = scmp.eq.s32.totalorder %s26, 1
      %p154 = por %p152, %p153
      %p156 = scmp.ne.s32.totalorder %s141, %s155
      %p157 = scmp.eq.s32.totalorder %s26, 0
      %p158 = por %p156, %p157
      %s159 = ssub.s32 %s20, %s27
      %p160 = scmp.eq.s32.totalorder %s159, 0
      %s162 = sadd.s32 %s161, 1
      %s163 = scalar_select %p160, %s161, %s162
      %p166 = pneg %p160
      %p167 = scmp.eq.s32.totalorder %s20, 1
      %p168 = por %p166, %p167
      %p169 = scmp.ne.s32.totalorder %s161, %s164
      %p170 = scmp.eq.s32.totalorder %s20, 0
      %p171 = por %p169, %p170
      %p172 = scmp.ne.s32.totalorder %s161, %s164
      %p173 = scmp.eq.s32.totalorder %s25, 1
      %p174 = por %p172, %p173
      %p175 = scmp.ne.s32.totalorder %s164, %s165
      %p176 = scmp.eq.s32.totalorder %s25, 0
      %p177 = por %p175, %p176
      %p178 = scmp.ne.s32.totalorder %s164, %s165
      %p179 = scmp.eq.s32.totalorder %s26, 1
      %p180 = por %p178, %p179
      %p182 = scmp.ne.s32.totalorder %s165, %s181
      %p183 = scmp.eq.s32.totalorder %s26, 0
      %p184 = por %p182, %p183
      %p185 = scmp.le.s32.totalorder 1, %s20
      %p186 = scmp.lt.s32.totalorder %s20, 3
      %p187 = pnand %p185, %p186
      %p188 = pneg %p187
      // Predicated region
      $region9: #{tpu_custom_call.1} parent=5 // pred_check
        _
      $region10: #{tpu_custom_call.1} parent=5 // pred_check_branch
        %190 = sbr.rel (%p187) target = $region12
      $region11: #{tpu_custom_call.1} parent=5 // pred_region
        %s191 = ssub.s32 %s20, 1
        // Predicated region
        $region13: #{tpu_custom_call.1} parent=11 // pred_check
          %p192 = pneg %p67
        $region14: #{tpu_custom_call.1} parent=11 // pred_check_branch
          %194 = sbr.rel (%p192) target = $region16
        $region15: #{tpu_custom_call.1} parent=11 // pred_region
          %196 = vsyncadd [#allocation6], 0
          %s197 = sshll.u32 %s1, 4
          %s198 = int_to_ptr.hbm [resolvable:$true] %s197
          %s199 = sshll.u32 [#allocation5], 4
          %s200 = int_to_ptr.vmem [resolvable:$true] %s199
          %205 = dma.hbm_to_vmem [thread:$0]  %s198, 4096, %s200, [#allocation6], 128, 128, 8
        $region16: #{tpu_custom_call.1} parent=11 // pred_fallthru
          _
        // Predicated region
        $region17: #{tpu_custom_call.1} parent=11 // pred_check
          %p206 = pneg %p88
        $region18: #{tpu_custom_call.1} parent=11 // pred_check_branch
          %208 = sbr.rel (%p206) target = $region20
        $region19: #{tpu_custom_call.1} parent=11 // pred_region
          _
        $region20: #{tpu_custom_call.1} parent=11 // pred_fallthru
          _
        // Predicated region
        $region21: #{tpu_custom_call.1} parent=11 // pred_check
          %p209 = pneg %p109
        $region22: #{tpu_custom_call.1} parent=11 // pred_check_branch
          %211 = sbr.rel (%p209) target = $region24
        $region23: #{tpu_custom_call.1} parent=11 // pred_region
          %213 = vsyncadd [#allocation6], 0
          %s214 = sshll.u32 %s3, 4
          %s215 = int_to_ptr.hbm [resolvable:$true] %s214
          %s216 = sshll.u32 [#allocation7], 4
          %s217 = int_to_ptr.vmem [resolvable:$true] %s216
          %222 = dma.hbm_to_vmem [thread:$0]  %s215, 256, %s217, [#allocation6], 128, 128, 8
        $region24: #{tpu_custom_call.1} parent=11 // pred_fallthru
          _
        // Predicated region
        $region25: #{tpu_custom_call.1} parent=11 // pred_check
          %p223 = pneg %p130
        $region26: #{tpu_custom_call.1} parent=11 // pred_check_branch
          %225 = sbr.rel (%p223) target = $region28
        $region27: #{tpu_custom_call.1} parent=11 // pred_region
          %227 = vsyncadd [#allocation9], 0
          %s228 = sshll.u32 %s4, 4
          %s229 = int_to_ptr.hbm [resolvable:$true] %s228
          %s230 = sshll.u32 [#allocation8], 4
          %s231 = int_to_ptr.vmem [resolvable:$true] %s230
          %236 = dma.hbm_to_vmem [thread:$0]  %s229, 2048, %s231, [#allocation9], 128, 128, 8
        $region28: #{tpu_custom_call.1} parent=11 // pred_fallthru
          _
        // Predicated region
        $region29: #{tpu_custom_call.1} parent=11 // pred_check
          %p237 = pneg %p151
        $region30: #{tpu_custom_call.1} parent=11 // pred_check_branch
          %239 = sbr.rel (%p237) target = $region32
        $region31: #{tpu_custom_call.1} parent=11 // pred_region
          _
        $region32: #{tpu_custom_call.1} parent=11 // pred_fallthru
          _
      $region12: #{tpu_custom_call.1} parent=5 // pred_fallthru
        _
      %p240 = scmp.lt.s32.totalorder %s20, 2
      // Predicated region
      $region33: #{tpu_custom_call.1} parent=5 // pred_check
        %p241 = pneg %p240
      $region34: #{tpu_custom_call.1} parent=5 // pred_check_branch
        %243 = sbr.rel (%p241) target = $region36
      $region35: #{tpu_custom_call.1} parent=5 // pred_region
        // Predicated region
        $region37: #{tpu_custom_call.1} parent=35 // pred_check
          %p244 = pneg %p40
        $region38: #{tpu_custom_call.1} parent=35 // pred_check_branch
          %246 = sbr.rel (%p244) target = $region40
        $region39: #{tpu_custom_call.1} parent=35 // pred_region
          %s247 = sand.u32 %s30, 1
          %s248 = scalar_lea.sflag [#allocation3], %s247
          %s249 = sand.u32 %s30, 1
          %s250 = smul.addr %s249, 256
          %s251 = scalar_lea.vmem [#allocation2], %s250
          %s252 = smul.u32 16, %s20
          %254 = vsyncadd %s248, 0
          %s255 = smul.addr %s252, 2
          %s256 = smul.addr %s255, 8
          %s257 = scalar_lea.hbm %s0, %s256
          %s258 = sshll.u32 %s257, 4
          %s259 = int_to_ptr.hbm [resolvable:$true] %s258
          %s260 = sshll.u32 %s251, 4
          %s261 = int_to_ptr.vmem [resolvable:$true] %s260
          %266 = dma.hbm_to_vmem [thread:$0]  %s259, 4096, %s261, %s248, 256, 256, 16
        $region40: #{tpu_custom_call.1} parent=35 // pred_fallthru
          _
      $region36: #{tpu_custom_call.1} parent=5 // pred_fallthru
        _
      %p267 = scmp.le.s32.totalorder 1, %s20
      %p268 = scmp.lt.s32.totalorder %s20, 3
      %p269 = pnand %p267, %p268
      %p270 = pneg %p269
      // Predicated region
      $region41: #{tpu_custom_call.1} parent=5 // pred_check
        _
      $region42: #{tpu_custom_call.1} parent=5 // pred_check_branch
        %272 = sbr.rel (%p269) target = $region44
      $region43: #{tpu_custom_call.1} parent=5 // pred_region
        %s273 = ssub.s32 %s20, 1
        %s274 = sand.u32 %s33, 1
        %s275 = scalar_lea.sflag [#allocation3], %s274
        %s276 = sand.u32 %s33, 1
        %s277 = smul.addr %s276, 256
        %s278 = scalar_lea.vmem [#allocation2], %s277
        // Predicated region
        $region45: #{tpu_custom_call.1} parent=43 // pred_check
          %p279 = pneg %p46
        $region46: #{tpu_custom_call.1} parent=43 // pred_check_branch
          %281 = sbr.rel (%p279) target = $region48
        $region47: #{tpu_custom_call.1} parent=43 // pred_region
          %283 = dma.done %s275, 4096
        $region48: #{tpu_custom_call.1} parent=43 // pred_fallthru
          _
        // Predicated region
        $region49: #{tpu_custom_call.1} parent=43 // pred_check
          %p284 = pneg %p67
        $region50: #{tpu_custom_call.1} parent=43 // pred_check_branch
          %286 = sbr.rel (%p284) target = $region52
        $region51: #{tpu_custom_call.1} parent=43 // pred_region
          %288 = dma.done [#allocation6], 4096
        $region52: #{tpu_custom_call.1} parent=43 // pred_fallthru
          _
        // Predicated region
        $region53: #{tpu_custom_call.1} parent=43 // pred_check
          %p289 = pneg %p109
        $region54: #{tpu_custom_call.1} parent=43 // pred_check_branch
          %291 = sbr.rel (%p289) target = $region56
        $region55: #{tpu_custom_call.1} parent=43 // pred_region
          %293 = dma.done [#allocation6], 256
        $region56: #{tpu_custom_call.1} parent=43 // pred_fallthru
          _
        // Predicated region
        $region57: #{tpu_custom_call.1} parent=43 // pred_check
          %p294 = pneg %p130
        $region58: #{tpu_custom_call.1} parent=43 // pred_check_branch
          %296 = sbr.rel (%p294) target = $region60
        $region59: #{tpu_custom_call.1} parent=43 // pred_region
          %298 = dma.done [#allocation9], 2048
        $region60: #{tpu_custom_call.1} parent=43 // pred_fallthru
          _
        %s299 = sand.u32 %s33, 1
        %s300 = scalar_lea.sflag [#allocation3], %s299
        %s301 = sand.u32 %s33, 1
        %s302 = smul.addr %s301, 256
        %s303 = scalar_lea.vmem [#allocation2], %s302
        %p304 = pneg %p46
        %p305 = pneg %p43
        %p306 = pneg %p67
        %p307 = pneg %p64
        %p308 = pneg %p88
        %p309 = pneg %p85
        %p310 = pneg %p109
        %p311 = pneg %p106
        %p312 = pneg %p130
        %p313 = pneg %p127
        %p314 = pneg %p151
        %p315 = pneg %p148
        %p316 = pneg %p177
        %p317 = pneg %p174
        %s318 = sand.u32 %s164, 1
        %s319 = scalar_lea.sflag [#allocation4], %s318
        %s320 = sand.u32 %s164, 1
        %s321 = smul.addr %s320, 8
        %s322 = scalar_lea.vmem [#allocation10], %s321
        %s323 = smul.u32 16, %s25
        %v324 = vld [vmem:[%s278] sm:$0xff]
        %v325 = vld [vmem:[%s278 + $0x8] sm:$0xff]
        %v326 = vld [vmem:[%s278 + $0x10] sm:$0xff]
        %v327 = vld [vmem:[%s278 + $0x18] sm:$0xff]
        %v328 = vld [vmem:[%s278 + $0x20] sm:$0xff]
        %v329 = vld [vmem:[%s278 + $0x28] sm:$0xff]
        %v330 = vld [vmem:[%s278 + $0x30] sm:$0xff]
        %v331 = vld [vmem:[%s278 + $0x38] sm:$0xff]
        %v332 = vld [vmem:[%s278 + $0x40] sm:$0xff]
        %v333 = vld [vmem:[%s278 + $0x48] sm:$0xff]
        %v334 = vld [vmem:[%s278 + $0x50] sm:$0xff]
        %v335 = vld [vmem:[%s278 + $0x58] sm:$0xff]
        %v336 = vld [vmem:[%s278 + $0x60] sm:$0xff]
        %v337 = vld [vmem:[%s278 + $0x68] sm:$0xff]
        %v338 = vld [vmem:[%s278 + $0x70] sm:$0xff]
        %v339 = vld [vmem:[%s278 + $0x78] sm:$0xff]
        %v340 = vld [vmem:[%s278 + $0x80] sm:$0xff]
        %v341 = vld [vmem:[%s278 + $0x88] sm:$0xff]
        %v342 = vld [vmem:[%s278 + $0x90] sm:$0xff]
        %v343 = vld [vmem:[%s278 + $0x98] sm:$0xff]
        %v344 = vld [vmem:[%s278 + $0xa0] sm:$0xff]
        %v345 = vld [vmem:[%s278 + $0xa8] sm:$0xff]
        %v346 = vld [vmem:[%s278 + $0xb0] sm:$0xff]
        %v347 = vld [vmem:[%s278 + $0xb8] sm:$0xff]
        %v348 = vld [vmem:[%s278 + $0xc0] sm:$0xff]
        %v349 = vld [vmem:[%s278 + $0xc8] sm:$0xff]
        %v350 = vld [vmem:[%s278 + $0xd0] sm:$0xff]
        %v351 = vld [vmem:[%s278 + $0xd8] sm:$0xff]
        %v352 = vld [vmem:[%s278 + $0xe0] sm:$0xff]
        %v353 = vld [vmem:[%s278 + $0xe8] sm:$0xff]
        %v354 = vld [vmem:[%s278 + $0xf0] sm:$0xff]
        %v355 = vld [vmem:[%s278 + $0xf8] sm:$0xff]
        %v356 = vld [vmem:[#allocation5] sm:$0xff]
        %v357 = vld [vmem:[#allocation5 + $0x8] sm:$0xff]
        %v358 = vld [vmem:[#allocation5 + $0x10] sm:$0xff]
        %v359 = vld [vmem:[#allocation5 + $0x18] sm:$0xff]
        %v360 = vld [vmem:[#allocation5 + $0x20] sm:$0xff]
        %v361 = vld [vmem:[#allocation5 + $0x28] sm:$0xff]
        %v362 = vld [vmem:[#allocation5 + $0x30] sm:$0xff]
        %v363 = vld [vmem:[#allocation5 + $0x38] sm:$0xff]
        %v364 = vld [vmem:[#allocation5 + $0x40] sm:$0xff]
        %v365 = vld [vmem:[#allocation5 + $0x48] sm:$0xff]
        %v366 = vld [vmem:[#allocation5 + $0x50] sm:$0xff]
        %v367 = vld [vmem:[#allocation5 + $0x58] sm:$0xff]
        %v368 = vld [vmem:[#allocation5 + $0x60] sm:$0xff]
        %v369 = vld [vmem:[#allocation5 + $0x68] sm:$0xff]
        %v370 = vld [vmem:[#allocation5 + $0x70] sm:$0xff]
        %v371 = vld [vmem:[#allocation5 + $0x78] sm:$0xff]
        %v372 = vld [vmem:[#allocation5 + $0x80] sm:$0xff]
        %v373 = vld [vmem:[#allocation5 + $0x88] sm:$0xff]
        %v374 = vld [vmem:[#allocation5 + $0x90] sm:$0xff]
        %v375 = vld [vmem:[#allocation5 + $0x98] sm:$0xff]
        %v376 = vld [vmem:[#allocation5 + $0xa0] sm:$0xff]
        %v377 = vld [vmem:[#allocation5 + $0xa8] sm:$0xff]
        %v378 = vld [vmem:[#allocation5 + $0xb0] sm:$0xff]
        %v379 = vld [vmem:[#allocation5 + $0xb8] sm:$0xff]
        %v380 = vld [vmem:[#allocation5 + $0xc0] sm:$0xff]
        %v381 = vld [vmem:[#allocation5 + $0xc8] sm:$0xff]
        %v382 = vld [vmem:[#allocation5 + $0xd0] sm:$0xff]
        %v383 = vld [vmem:[#allocation5 + $0xd8] sm:$0xff]
        %v384 = vld [vmem:[#allocation5 + $0xe0] sm:$0xff]
        %v385 = vld [vmem:[#allocation5 + $0xe8] sm:$0xff]
        %v386 = vld [vmem:[#allocation5 + $0xf0] sm:$0xff]
        %v387 = vld [vmem:[#allocation5 + $0xf8] sm:$0xff]
        %v388 = vld [vmem:[%s2] sm:$0x1]
        %v390 = vperm.slane %v388, 0
        %392 = vmatpush.msra.mxu0 %v371
        %393 = vmatpush.msra.mxu0 %v370
        %394 = vmatpush.msra.mxu0 %v369
        %395 = vmatpush.msra.mxu0 %v368
        %396 = vmatpush.msra.mxu0 %v367
        %397 = vmatpush.msra.mxu0 %v366
        %398 = vmatpush.msra.mxu0 %v365
        %399 = vmatpush.msra.mxu0 %v364
        %400 = vmatpush.msra.mxu0 %v363
        %401 = vmatpush.msra.mxu0 %v362
        %402 = vmatpush.msra.mxu0 %v361
        %403 = vmatpush.msra.mxu0 %v360
        %404 = vmatpush.msra.mxu0 %v359
        %405 = vmatpush.msra.mxu0 %v358
        %406 = vmatpush.msra.mxu0 %v357
        %407 = vmatpush.msra.mxu0 %v356
        %408 = vmatmul.f32.gmra.mxu0 %v324
        %v409 = vpop.f32.mrf.mxu0
        %v410 = vadd.f32 %v390, %v409
        %411 = vmatmul.f32.gmra.mxu0 %v326
        %v412 = vpop.f32.mrf.mxu0
        %v413 = vadd.f32 %v390, %v412
        %414 = vmatmul.f32.gmra.mxu0 %v328
        %v415 = vpop.f32.mrf.mxu0
        %v416 = vadd.f32 %v390, %v415
        %417 = vmatmul.f32.gmra.mxu0 %v330
        %v418 = vpop.f32.mrf.mxu0
        %v419 = vadd.f32 %v390, %v418
        %420 = vmatmul.f32.gmra.mxu0 %v332
        %v421 = vpop.f32.mrf.mxu0
        %v422 = vadd.f32 %v390, %v421
        %423 = vmatmul.f32.gmra.mxu0 %v334
        %v424 = vpop.f32.mrf.mxu0
        %v425 = vadd.f32 %v390, %v424
        %426 = vmatmul.f32.gmra.mxu0 %v336
        %v427 = vpop.f32.mrf.mxu0
        %v428 = vadd.f32 %v390, %v427
        %429 = vmatmul.f32.gmra.mxu0 %v338
        %v430 = vpop.f32.mrf.mxu0
        %v431 = vadd.f32 %v390, %v430
        %432 = vmatmul.f32.gmra.mxu0 %v340
        %v433 = vpop.f32.mrf.mxu0
        %v434 = vadd.f32 %v390, %v433
        %435 = vmatmul.f32.gmra.mxu0 %v342
        %v436 = vpop.f32.mrf.mxu0
        %v437 = vadd.f32 %v390, %v436
        %438 = vmatmul.f32.gmra.mxu0 %v344
        %v439 = vpop.f32.mrf.mxu0
        %v440 = vadd.f32 %v390, %v439
        %441 = vmatmul.f32.gmra.mxu0 %v346
        %v442 = vpop.f32.mrf.mxu0
        %v443 = vadd.f32 %v390, %v442
        %444 = vmatmul.f32.gmra.mxu0 %v348
        %v445 = vpop.f32.mrf.mxu0
        %v446 = vadd.f32 %v390, %v445
        %447 = vmatmul.f32.gmra.mxu0 %v350
        %v448 = vpop.f32.mrf.mxu0
        %v449 = vadd.f32 %v390, %v448
        %450 = vmatmul.f32.gmra.mxu0 %v352
        %v451 = vpop.f32.mrf.mxu0
        %v452 = vadd.f32 %v390, %v451
        %453 = vmatmul.f32.gmra.mxu0 %v354
        %v454 = vpop.f32.mrf.mxu0
        %v455 = vadd.f32 %v390, %v454
        %456 = vdwg.mxu0
        %457 = vmatpush.msra.mxu0 %v387
        %458 = vmatpush.msra.mxu0 %v386
        %459 = vmatpush.msra.mxu0 %v385
        %460 = vmatpush.msra.mxu0 %v384
        %461 = vmatpush.msra.mxu0 %v383
        %462 = vmatpush.msra.mxu0 %v382
        %463 = vmatpush.msra.mxu0 %v381
        %464 = vmatpush.msra.mxu0 %v380
        %465 = vmatpush.msra.mxu0 %v379
        %466 = vmatpush.msra.mxu0 %v378
        %467 = vmatpush.msra.mxu0 %v377
        %468 = vmatpush.msra.mxu0 %v376
        %469 = vmatpush.msra.mxu0 %v375
        %470 = vmatpush.msra.mxu0 %v374
        %471 = vmatpush.msra.mxu0 %v373
        %472 = vmatpush.msra.mxu0 %v372
        %473 = vmatmul.f32.gmra.mxu0 %v325
        %v474 = vpop.f32.mrf.mxu0
        %v475 = vadd.f32 %v410, %v474
        %476 = vmatmul.f32.gmra.mxu0 %v327
        %v477 = vpop.f32.mrf.mxu0
        %v478 = vadd.f32 %v413, %v477
        %479 = vmatmul.f32.gmra.mxu0 %v329
        %v480 = vpop.f32.mrf.mxu0
        %v481 = vadd.f32 %v416, %v480
        %482 = vmatmul.f32.gmra.mxu0 %v331
        %v483 = vpop.f32.mrf.mxu0
        %v484 = vadd.f32 %v419, %v483
        %485 = vmatmul.f32.gmra.mxu0 %v333
        %v486 = vpop.f32.mrf.mxu0
        %v487 = vadd.f32 %v422, %v486
        %488 = vmatmul.f32.gmra.mxu0 %v335
        %v489 = vpop.f32.mrf.mxu0
        %v490 = vadd.f32 %v425, %v489
        %491 = vmatmul.f32.gmra.mxu0 %v337
        %v492 = vpop.f32.mrf.mxu0
        %v493 = vadd.f32 %v428, %v492
        %494 = vmatmul.f32.gmra.mxu0 %v339
        %v495 = vpop.f32.mrf.mxu0
        %v496 = vadd.f32 %v431, %v495
        %497 = vmatmul.f32.gmra.mxu0 %v341
        %v498 = vpop.f32.mrf.mxu0
        %v499 = vadd.f32 %v434, %v498
        %500 = vmatmul.f32.gmra.mxu0 %v343
        %v501 = vpop.f32.mrf.mxu0
        %v502 = vadd.f32 %v437, %v501
        %503 = vmatmul.f32.gmra.mxu0 %v345
        %v504 = vpop.f32.mrf.mxu0
        %v505 = vadd.f32 %v440, %v504
        %506 = vmatmul.f32.gmra.mxu0 %v347
        %v507 = vpop.f32.mrf.mxu0
        %v508 = vadd.f32 %v443, %v507
        %509 = vmatmul.f32.gmra.mxu0 %v349
        %v510 = vpop.f32.mrf.mxu0
        %v511 = vadd.f32 %v446, %v510
        %512 = vmatmul.f32.gmra.mxu0 %v351
        %v513 = vpop.f32.mrf.mxu0
        %v514 = vadd.f32 %v449, %v513
        %515 = vmatmul.f32.gmra.mxu0 %v353
        %v516 = vpop.f32.mrf.mxu0
        %v517 = vadd.f32 %v452, %v516
        %518 = vmatmul.f32.gmra.mxu0 %v355
        %v519 = vpop.f32.mrf.mxu0
        %v520 = vadd.f32 %v455, %v519
        %521 = vdwg.mxu0
        %v522 = vmax.f32 %v475, 0.0
        %v523 = vmax.f32 %v478, 0.0
        %v524 = vmax.f32 %v481, 0.0
        %v525 = vmax.f32 %v484, 0.0
        %v526 = vmax.f32 %v487, 0.0
        %v527 = vmax.f32 %v490, 0.0
        %v528 = vmax.f32 %v493, 0.0
        %v529 = vmax.f32 %v496, 0.0
        %v530 = vmax.f32 %v499, 0.0
        %v531 = vmax.f32 %v502, 0.0
        %v532 = vmax.f32 %v505, 0.0
        %v533 = vmax.f32 %v508, 0.0
        %v534 = vmax.f32 %v511, 0.0
        %v535 = vmax.f32 %v514, 0.0
        %v536 = vmax.f32 %v517, 0.0
        %v537 = vmax.f32 %v520, 0.0
        %v538 = vld [vmem:[#allocation7] sm:$0xff]
        %v539 = vld [vmem:[#allocation7 + $0x8] sm:$0xff]
        %v540 = vmul.f32 %v522, %v538
        %v541 = vmul.f32 %v523, %v539
        %v542 = vmul.f32 %v524, %v538
        %v543 = vmul.f32 %v525, %v539
        %v544 = vmul.f32 %v526, %v538
        %v545 = vmul.f32 %v527, %v539
        %v546 = vmul.f32 %v528, %v538
        %v547 = vmul.f32 %v529, %v539
        %v548 = vmul.f32 %v530, %v538
        %v549 = vmul.f32 %v531, %v539
        %v550 = vmul.f32 %v532, %v538
        %v551 = vmul.f32 %v533, %v539
        %v552 = vmul.f32 %v534, %v538
        %v553 = vmul.f32 %v535, %v539
        %v554 = vmul.f32 %v536, %v538
        %v555 = vmul.f32 %v537, %v539
        %v556 = vmax.f32 %v540, %v541
        %v557 = vrot.slane %v556, 4
        %v558 = vmax.f32 %v556, %v557
        %v559 = vrot.slane %v558, 2
        %v560 = vmax.f32 %v558, %v559
        %v561 = vrot.slane %v560, 1
        %v562 = vmax.f32 %v560, %v561
        %v563 = vmax.f32 %v542, %v543
        %v564 = vrot.slane %v563, 4
        %v565 = vmax.f32 %v563, %v564
        %v566 = vrot.slane %v565, 2
        %v567 = vmax.f32 %v565, %v566
        %v568 = vrot.slane %v567, 1
        %v569 = vmax.f32 %v567, %v568
        %v570 = vmax.f32 %v544, %v545
        %v571 = vrot.slane %v570, 4
        %v572 = vmax.f32 %v570, %v571
        %v573 = vrot.slane %v572, 2
        %v574 = vmax.f32 %v572, %v573
        %v575 = vrot.slane %v574, 1
        %v576 = vmax.f32 %v574, %v575
        %v577 = vmax.f32 %v546, %v547
        %v578 = vrot.slane %v577, 4
        %v579 = vmax.f32 %v577, %v578
        %v580 = vrot.slane %v579, 2
        %v581 = vmax.f32 %v579, %v580
        %v582 = vrot.slane %v581, 1
        %v583 = vmax.f32 %v581, %v582
        %v584 = vmax.f32 %v548, %v549
        %v585 = vrot.slane %v584, 4
        %v586 = vmax.f32 %v584, %v585
        %v587 = vrot.slane %v586, 2
        %v588 = vmax.f32 %v586, %v587
        %v589 = vrot.slane %v588, 1
        %v590 = vmax.f32 %v588, %v589
        %v591 = vmax.f32 %v550, %v551
        %v592 = vrot.slane %v591, 4
        %v593 = vmax.f32 %v591, %v592
        %v594 = vrot.slane %v593, 2
        %v595 = vmax.f32 %v593, %v594
        %v596 = vrot.slane %v595, 1
        %v597 = vmax.f32 %v595, %v596
        %v598 = vmax.f32 %v552, %v553
        %v599 = vrot.slane %v598, 4
        %v600 = vmax.f32 %v598, %v599
        %v601 = vrot.slane %v600, 2
        %v602 = vmax.f32 %v600, %v601
        %v603 = vrot.slane %v602, 1
        %v604 = vmax.f32 %v602, %v603
        %v605 = vmax.f32 %v554, %v555
        %v606 = vrot.slane %v605, 4
        %v607 = vmax.f32 %v605, %v606
        %v608 = vrot.slane %v607, 2
        %v609 = vmax.f32 %v607, %v608
        %v610 = vrot.slane %v609, 1
        %v611 = vmax.f32 %v609, %v610
        %v612 = vld [vmem:[#allocation8] sm:$0xff]
        %v613 = vld [vmem:[#allocation8 + $0x8] sm:$0xff]
        %v614 = vld [vmem:[#allocation8 + $0x10] sm:$0xff]
        %v615 = vld [vmem:[#allocation8 + $0x18] sm:$0xff]
        %v616 = vld [vmem:[#allocation8 + $0x20] sm:$0xff]
        %v617 = vld [vmem:[#allocation8 + $0x28] sm:$0xff]
        %v618 = vld [vmem:[#allocation8 + $0x30] sm:$0xff]
        %v619 = vld [vmem:[#allocation8 + $0x38] sm:$0xff]
        %v620 = vld [vmem:[#allocation8 + $0x40] sm:$0xff]
        %v621 = vld [vmem:[#allocation8 + $0x48] sm:$0xff]
        %v622 = vld [vmem:[#allocation8 + $0x50] sm:$0xff]
        %v623 = vld [vmem:[#allocation8 + $0x58] sm:$0xff]
        %v624 = vld [vmem:[#allocation8 + $0x60] sm:$0xff]
        %v625 = vld [vmem:[#allocation8 + $0x68] sm:$0xff]
        %v626 = vld [vmem:[#allocation8 + $0x70] sm:$0xff]
        %v627 = vld [vmem:[#allocation8 + $0x78] sm:$0xff]
        %v628 = vld [vmem:[%s5] sm:$0x1]
        %v630 = vperm.slane %v628, 0
        %vm640 = vcmask 1041409
        %v641 = vsel %vm640, %v569, %v562
        %vm642 = vcmask 1042434
        %v643 = vsel %vm642, %v576, %v641
        %vm644 = vcmask 1043459
        %v645 = vsel %vm644, %v583, %v643
        %vm646 = vcmask 1044484
        %v647 = vsel %vm646, %v590, %v645
        %vm648 = vcmask 1045509
        %v649 = vsel %vm648, %v597, %v647
        %vm650 = vcmask 1046534
        %v651 = vsel %vm650, %v604, %v649
        %vm652 = vcmask 1047559
        %v653 = vsel %vm652, %v611, %v651
        %655 = vmatpush.msra.mxu0 %v627
        %656 = vmatpush.msra.mxu0 %v626
        %657 = vmatpush.msra.mxu0 %v625
        %658 = vmatpush.msra.mxu0 %v624
        %659 = vmatpush.msra.mxu0 %v623
        %660 = vmatpush.msra.mxu0 %v622
        %661 = vmatpush.msra.mxu0 %v621
        %662 = vmatpush.msra.mxu0 %v620
        %663 = vmatpush.msra.mxu0 %v619
        %664 = vmatpush.msra.mxu0 %v618
        %665 = vmatpush.msra.mxu0 %v617
        %666 = vmatpush.msra.mxu0 %v616
        %667 = vmatpush.msra.mxu0 %v615
        %668 = vmatpush.msra.mxu0 %v614
        %669 = vmatpush.msra.mxu0 %v613
        %670 = vmatpush.msra.mxu0 %v612
        %671 = vmatmul.f32.gmra.mxu0 %v653
        %v672 = vpop.f32.mrf.mxu0
        %v673 = vadd.f32 %v630, %v672
        %674 = vdwg.mxu0
        %675 = vst [vmem:[%s322] sm:$0xff] %v673
        %s676 = sand.u32 %s164, 1
        %s677 = scalar_lea.sflag [#allocation4], %s676
        %s678 = sand.u32 %s164, 1
        %s679 = smul.addr %s678, 8
        %s680 = scalar_lea.vmem [#allocation10], %s679
        // Predicated region
        $region61: #{tpu_custom_call.1} parent=43 // pred_check
          %p681 = pneg %p174
        $region62: #{tpu_custom_call.1} parent=43 // pred_check_branch
          %683 = sbr.rel (%p681) target = $region64
        $region63: #{tpu_custom_call.1} parent=43 // pred_region
          %685 = vsyncadd %s677, 0
          %s686 = smul.addr %s25, 8
          %s687 = scalar_lea.hbm %s6, %s686
          %s689 = sshll.u32 %s680, 4
          %s690 = int_to_ptr.vmem [resolvable:$true] %s689
          %s691 = sshll.u32 %s687, 4
          %s692 = int_to_ptr.hbm [resolvable:$true] %s691
          %694 = dma.vmem_to_hbm [thread:$0]  %s690, 128, %s692, %s677
        $region64: #{tpu_custom_call.1} parent=43 // pred_fallthru
          _
      $region44: #{tpu_custom_call.1} parent=5 // pred_fallthru
        _
      %p695 = scmp.le.s32.totalorder 2, %s20
      // Predicated region
      $region65: #{tpu_custom_call.1} parent=5 // pred_check
        %p696 = pneg %p695
      $region66: #{tpu_custom_call.1} parent=5 // pred_check_branch
        %698 = sbr.rel (%p696) target = $region68
      $region67: #{tpu_custom_call.1} parent=5 // pred_region
        %s699 = ssub.s32 %s20, 2
        // Predicated region
        $region69: #{tpu_custom_call.1} parent=67 // pred_check
          %p700 = pneg %p180
        $region70: #{tpu_custom_call.1} parent=67 // pred_check_branch
          %702 = sbr.rel (%p700) target = $region72
        $region71: #{tpu_custom_call.1} parent=67 // pred_region
          %s703 = sand.u32 %s165, 1
          %s704 = scalar_lea.sflag [#allocation4], %s703
          %s705 = sand.u32 %s165, 1
          %s706 = smul.addr %s705, 8
          %s707 = scalar_lea.vmem [#allocation10], %s706
          %709 = dma.done %s704, 128
        $region72: #{tpu_custom_call.1} parent=67 // pred_fallthru
          _
      $region68: #{tpu_custom_call.1} parent=5 // pred_fallthru
        _
    $region6: #{tpu_custom_call.1} parent=1 // loop_footer
      %s24 = sadd.s32 1, %s20
    $region7: #{tpu_custom_call.1} parent=1 // loop_footer_branch
      %19 = sbr.rel target = $region3
    $region8: #{tpu_custom_call.1} parent=1 // loop_exit
      _
    %710 = vsyncpa [#allocation3], 1
    %s711 = scalar_lea.sflag [#allocation3], 1
    %712 = vsyncpa %s711, 1
    %713 = vsyncpa [#allocation6], 1
    %714 = vsyncpa [#allocation9], 1
    %715 = vsyncpa [#allocation4], 1
    %s716 = scalar_lea.sflag [#allocation4], 1
    %717 = vsyncpa %s716, 1

</llo_original>
